<compile_context>
chip_gen: v5e
topology: v5e:2x2
jax: 0.10.0
libtpu: 0.0.40
codegen_flags: <defaults>
</compile_context>

<pallas_src>
import jax
import jax.numpy as jnp
from jax.experimental import pallas as pl
from jax.experimental.pallas import tpu as pltpu


def _mlp_logsoftmax_kernel(x_ref, w1_ref, b1_ref, w2_ref, b2_ref, o_ref):
    # relu on the (bf16) input tile; relu commutes with the bf16 cast so this
    # matches relu-in-f32-then-cast exactly
    x = jnp.maximum(x_ref[...], 0.0)  # bf16

    b1 = b1_ref[...]  # (1, WIDTH_P) f32
    b2 = b2_ref[...]  # (1, NO_P)    f32  (pad lanes hold -1e30 -> masked logits)

    # first Linear (nI_p -> width_p): bf16 operands, f32 accumulate; relu in f32
    h = jnp.dot(x, w1_ref[...], preferred_element_type=jnp.float32) + b1
    h = jnp.maximum(h, 0.0)

    # second Linear (width_p -> nO_p): bf16 operands, f32 accumulate
    y = jnp.dot(h.astype(jnp.bfloat16), w2_ref[...],
                preferred_element_type=jnp.float32) + b2

    # pad columns already carry ~-1e30 (folded into b2), so no explicit mask:
    # numerically-stable log_softmax over dim=1 (feature / last axis)
    m = jnp.max(y, axis=-1, keepdims=True)
    s = y - m
    lse = jnp.log(jnp.sum(jnp.exp(s), axis=-1, keepdims=True))
    o_ref[...] = (s - lse).astype(o_ref.dtype)


def _round_up(v, m):
    return ((v + m - 1) // m) * m


def _choose_batch_tile(B, max_tb=1024):
    """Pick (TB, n_steps): TB multiple of 8, TB <= max_tb, n_steps even & >= 2
    so both v7x TensorCores are used when the grid axis is 'parallel'."""
    n_steps = max(2, pl.cdiv(B, max_tb))
    if n_steps % 2:
        n_steps += 1
    TB = _round_up(pl.cdiv(B, n_steps), 8)
    return TB, n_steps


def pytorch_model_forward(x, w1, b1, w2, b2, *, max_block_b=1024):
    """x: (B, nI) f32; w1: (width, nI); b1: (width,); w2: (nO, width); b2: (nO,)
    (PyTorch Linear layout).  Returns (B, nO) f32 log-probs."""
    B, nI = x.shape
    width = w1.shape[0]
    nO = w2.shape[0]

    # pad feature axes to 128 lanes; pick batch tile + even grid
    nI_p = _round_up(nI, 128)
    width_p = _round_up(width, 128)
    nO_p = _round_up(nO, 128)
    TB, n_steps = _choose_batch_tile(B, max_block_b)
    B_p = TB * n_steps

    # x stored bf16 in HBM (halves the dominant input stream); pad rows/cols 0
    x_p = jnp.zeros((B_p, nI_p), jnp.bfloat16).at[:B, :nI].set(
        x.astype(jnp.bfloat16))
    # weights pre-transposed to (in, out), zero-padded, stored bf16 in HBM
    w1_t = jnp.zeros((nI_p, width_p), jnp.float32).at[:nI, :width].set(
        w1.T.astype(jnp.float32)).astype(jnp.bfloat16)
    b1_p = jnp.zeros((1, width_p), jnp.float32).at[0, :width].set(
        b1.reshape(-1).astype(jnp.float32))
    w2_t = jnp.zeros((width_p, nO_p), jnp.float32).at[:width, :nO].set(
        w2.T.astype(jnp.float32)).astype(jnp.bfloat16)
    # fold the pad-column mask into the bias: pad lanes -> -1e30 so the padded
    # logits never win the row max nor contribute to the softmax sum
    b2_p = jnp.full((1, nO_p), -1e30, jnp.float32).at[0, :nO].set(
        b2.reshape(-1).astype(jnp.float32))

    grid = (n_steps,)

    flops = 2 * B_p * (nI_p * width_p + width_p * nO_p)
    bytes_accessed = (x_p.size * 2 + w1_t.size * 2 + w2_t.size * 2
                      + b1_p.size * 4 + b2_p.size * 4 + B_p * nO_p * 4)

    out_p = pl.pallas_call(
        _mlp_logsoftmax_kernel,
        out_shape=jax.ShapeDtypeStruct((B_p, nO_p), jnp.float32),
        grid=grid,
        in_specs=[
            pl.BlockSpec((TB, nI_p), lambda i: (i, 0)),       # x: tiled over batch
            pl.BlockSpec((nI_p, width_p), lambda i: (0, 0)),  # W1: resident
            pl.BlockSpec((1, width_p), lambda i: (0, 0)),     # b1: resident
            pl.BlockSpec((width_p, nO_p), lambda i: (0, 0)),  # W2: resident
            pl.BlockSpec((1, nO_p), lambda i: (0, 0)),        # b2: resident
        ],
        out_specs=pl.BlockSpec((TB, nO_p), lambda i: (i, 0)),
        compiler_params=pltpu.CompilerParams(
            dimension_semantics=("parallel",)),
        cost_estimate=pl.CostEstimate(
            flops=flops,
            transcendentals=B_p * (nO_p + 1),   # exp per logit + log per row
            bytes_accessed=bytes_accessed),
    )(x_p, w1_t, b1_p, w2_t, b2_p)

    # slice away batch/feature padding
    return out_p[:B, :nO]


if __name__ == "__main__":
    # small shapes consistent with the module; B big enough for 2 grid steps
    B, nI, width, nO = 512, 32, 64, 16

    key = jax.random.PRNGKey(0)
    kx, k1, k2, k3, k4 = jax.random.split(key, 5)

    x = jax.random.normal(kx, (B, nI), dtype=jnp.float32)

    # deterministic PyTorch-style Linear init: U(-1/sqrt(fan_in), 1/sqrt(fan_in))
    bound1 = 1.0 / jnp.sqrt(nI)
    w1 = jax.random.uniform(k1, (width, nI), jnp.float32, -bound1, bound1)  # (out, in)
    b1 = jax.random.uniform(k2, (width,), jnp.float32, -bound1, bound1)

    bound2 = 1.0 / jnp.sqrt(width)
    w2 = jax.random.uniform(k3, (nO, width), jnp.float32, -bound2, bound2)  # (out, in)
    b2 = jax.random.uniform(k4, (nO,), jnp.float32, -bound2, bound2)

    out = pytorch_model_forward(x, w1, b1, w2, b2, max_block_b=1024)
    out = jax.block_until_ready(out)
    assert out.shape == (B, nO)

    # reference with the same numerics (bf16 matmul operands, f32 accumulate)
    x_r = jnp.maximum(x.astype(jnp.bfloat16), 0)
    h_ref = jnp.dot(x_r, w1.T.astype(jnp.bfloat16),
                    preferred_element_type=jnp.float32) + b1[None, :]
    h_ref = jnp.maximum(h_ref, 0.0)
    y_ref = jnp.dot(h_ref.astype(jnp.bfloat16), w2.T.astype(jnp.bfloat16),
                    preferred_element_type=jnp.float32) + b2[None, :]
    ref = jax.nn.log_softmax(y_ref, axis=1)

    assert jnp.allclose(out, ref, atol=2e-3, rtol=2e-3), (
        float(jnp.max(jnp.abs(out - ref))))

    print("KERNEL_OK")
</pallas_src>

<mosaic_0001>
module attributes {stable_mosaic.version = 11 : i64} {
  func.func @_mlp_logsoftmax_kernel(%arg0: i32, %arg1: memref<256x128xbf16, #tpu.memory_space<vmem>>, %arg2: memref<128x128xbf16, #tpu.memory_space<vmem>>, %arg3: memref<1x128xf32, #tpu.memory_space<vmem>>, %arg4: memref<128x128xbf16, #tpu.memory_space<vmem>>, %arg5: memref<1x128xf32, #tpu.memory_space<vmem>>, %arg6: memref<256x128xf32, #tpu.memory_space<vmem>>) attributes {dimension_semantics = [#tpu.dimension_semantics<parallel>], iteration_bounds = array<i64: 2>, scalar_prefetch = 0 : i64, scratch_operands = 0 : i64, tpu.core_type = #tpu.core_type<tc>, window_params = [{transform_indices = @transform_0, window_bounds = array<i64: 256, 128>}, {pipeline_mode = #tpu.pipeline_mode<synchronous>, transform_indices = @transform_1, window_bounds = array<i64: 128, 128>}, {pipeline_mode = #tpu.pipeline_mode<synchronous>, transform_indices = @transform_2, window_bounds = array<i64: 1, 128>}, {pipeline_mode = #tpu.pipeline_mode<synchronous>, transform_indices = @transform_3, window_bounds = array<i64: 128, 128>}, {pipeline_mode = #tpu.pipeline_mode<synchronous>, transform_indices = @transform_4, window_bounds = array<i64: 1, 128>}, {transform_indices = @transform_5, window_bounds = array<i64: 256, 128>}]} {
    %c0 = arith.constant 0 : index
    %c0_0 = arith.constant 0 : index
    %0 = vector.load %arg1[%c0, %c0_0] : memref<256x128xbf16, #tpu.memory_space<vmem>>, vector<256x128xbf16>
    %cst = arith.constant 0.000000e+00 : bf16
    %1 = vector.broadcast %cst : bf16 to vector<256x128xbf16>
    %2 = arith.maximumf %0, %1 : vector<256x128xbf16>
    %c0_1 = arith.constant 0 : index
    %c0_2 = arith.constant 0 : index
    %3 = vector.load %arg3[%c0_1, %c0_2] : memref<1x128xf32, #tpu.memory_space<vmem>>, vector<1x128xf32>
    %c0_3 = arith.constant 0 : index
    %c0_4 = arith.constant 0 : index
    %4 = vector.load %arg5[%c0_3, %c0_4] : memref<1x128xf32, #tpu.memory_space<vmem>>, vector<1x128xf32>
    %c0_5 = arith.constant 0 : index
    %c0_6 = arith.constant 0 : index
    %5 = vector.load %arg2[%c0_5, %c0_6] : memref<128x128xbf16, #tpu.memory_space<vmem>>, vector<128x128xbf16>
    %cst_7 = arith.constant dense<0.000000e+00> : vector<256x128xf32>
    %6 = tpu.matmul %2, %5, %cst_7 {dimension_numbers = #tpu.dot_dimension_numbers<[1], [0], [0], [1], [0, 0, 1, 1], [], []>} : vector<256x128xbf16>, vector<128x128xbf16>, vector<256x128xf32> -> vector<256x128xf32>
    %7 = vector.broadcast %3 : vector<1x128xf32> to vector<256x128xf32>
    %8 = arith.addf %6, %7 : vector<256x128xf32>
    %cst_8 = arith.constant 0.000000e+00 : f32
    %9 = vector.broadcast %cst_8 : f32 to vector<256x128xf32>
    %10 = arith.maximumf %8, %9 : vector<256x128xf32>
    %11 = arith.truncf %10 : vector<256x128xf32> to vector<256x128xbf16>
    %c0_9 = arith.constant 0 : index
    %c0_10 = arith.constant 0 : index
    %12 = vector.load %arg4[%c0_9, %c0_10] : memref<128x128xbf16, #tpu.memory_space<vmem>>, vector<128x128xbf16>
    %cst_11 = arith.constant dense<0.000000e+00> : vector<256x128xf32>
    %13 = tpu.matmul %11, %12, %cst_11 {dimension_numbers = #tpu.dot_dimension_numbers<[1], [0], [0], [1], [0, 0, 1, 1], [], []>} : vector<256x128xbf16>, vector<128x128xbf16>, vector<256x128xf32> -> vector<256x128xf32>
    %14 = vector.broadcast %4 : vector<1x128xf32> to vector<256x128xf32>
    %15 = arith.addf %13, %14 : vector<256x128xf32>
    %cst_12 = arith.constant dense<0xFF800000> : vector<256xf32>
    %16 = vector.multi_reduction <maximumf>, %15, %cst_12 [1] : vector<256x128xf32> to vector<256xf32>
    %17 = vector.shape_cast %16 : vector<256xf32> to vector<256x1xf32>
    %18 = vector.broadcast %17 : vector<256x1xf32> to vector<256x128xf32>
    %19 = arith.subf %15, %18 : vector<256x128xf32>
    %20 = math.exp %19 : vector<256x128xf32>
    %cst_13 = arith.constant dense<0.000000e+00> : vector<256xf32>
    %21 = vector.multi_reduction <add>, %20, %cst_13 [1] : vector<256x128xf32> to vector<256xf32>
    %22 = vector.shape_cast %21 : vector<256xf32> to vector<256x1xf32>
    %23 = math.log %22 : vector<256x1xf32>
    %24 = vector.broadcast %23 : vector<256x1xf32> to vector<256x128xf32>
    %25 = arith.subf %19, %24 : vector<256x128xf32>
    %c0_14 = arith.constant 0 : index
    %c0_15 = arith.constant 0 : index
    %26 = vector.load %arg6[%c0_14, %c0_15] : memref<256x128xf32, #tpu.memory_space<vmem>>, vector<256x128xf32>
    tpu.vector_store %arg6[%c0_14, %c0_15], %25 {strides = array<i32>} : memref<256x128xf32, #tpu.memory_space<vmem>>, vector<256x128xf32>,
    return
  }
  func.func @transform_0(%arg0: i32) -> (i32, i32) {
    %c0_i32 = arith.constant 0 : i32
    %c0_i32_0 = arith.constant 0 : i32
    return %arg0, %c0_i32 : i32, i32
  }
  func.func @transform_1(%arg0: i32) -> (i32, i32) {
    %c0_i32 = arith.constant 0 : i32
    %c0_i32_0 = arith.constant 0 : i32
    %c0_i32_1 = arith.constant 0 : i32
    return %c0_i32, %c0_i32_0 : i32, i32
  }
  func.func @transform_2(%arg0: i32) -> (i32, i32) {
    %c0_i32 = arith.constant 0 : i32
    %c0_i32_0 = arith.constant 0 : i32
    %c0_i32_1 = arith.constant 0 : i32
    return %c0_i32, %c0_i32_0 : i32, i32
  }
  func.func @transform_3(%arg0: i32) -> (i32, i32) {
    %c0_i32 = arith.constant 0 : i32
    %c0_i32_0 = arith.constant 0 : i32
    %c0_i32_1 = arith.constant 0 : i32
    return %c0_i32, %c0_i32_0 : i32, i32
  }
  func.func @transform_4(%arg0: i32) -> (i32, i32) {
    %c0_i32 = arith.constant 0 : i32
    %c0_i32_0 = arith.constant 0 : i32
    %c0_i32_1 = arith.constant 0 : i32
    return %c0_i32, %c0_i32_0 : i32, i32
  }
  func.func @transform_5(%arg0: i32) -> (i32, i32) {
    %c0_i32 = arith.constant 0 : i32
    %c0_i32_0 = arith.constant 0 : i32
    return %arg0, %c0_i32 : i32, i32
  }
}

</mosaic_0001>

<llo_original>
// kernel: tpu_custom_call.1
$region0: #{tpu_custom_call.1}
  #allocation0 [shape = 'u32[]', space=smem, size = 0x4, offset = 0x4, fixed_abs, tag = 'smem constant byte address 0x4 - core index']
  #allocation1 [shape = 'u32[72,128]{1,0:T(1,128)}', space=vmem, size = 0x9000, scoped, tag = 'internal scratch']
  %s0 = inlined_call_operand.hbm [shape: bf16[512,128], index: 0, kind: input, shape index: {}]
  %s1 = inlined_call_operand.hbm [shape: bf16[128,128], index: 1, kind: input, shape index: {}]
  %s2 = inlined_call_operand.vmem [shape: f32[1,128], index: 2, kind: input, shape index: {}]
  %s3 = inlined_call_operand.hbm [shape: bf16[128,128], index: 3, kind: input, shape index: {}]
  %s4 = inlined_call_operand.vmem [shape: f32[1,128], index: 4, kind: input, shape index: {}]
  %s5 = inlined_call_operand.hbm [shape: f32[512,128], index: 5, kind: output, shape index: {}]
  %s6 = sld [smem:[#allocation0]]
  $region65: #{tpu_custom_call.1} parent=0
    _
  %s8 = ssub.s32 1, %s6
  %s9 = scalar_select 0, %s8, %s6
  $region1: #{tpu_custom_call.1} parent=0
    #allocation2 [shape = 'u8[131072]{0}', space=vmem, size = 0x20000, scoped, tag = 'input window, operand 0']
    #allocation3 [shape = 's32[2]{0}', space=sflag, size = 0x8, scoped, tag = 'scoped memory for tpu_custom_call.1']
    #allocation4 [shape = 's32[2]{0}', space=sflag, size = 0x8, scoped, tag = 'scoped memory for tpu_custom_call.1']
    #allocation5 [shape = 'u8[32768]{0}', space=vmem, size = 0x8000, scoped, tag = 'input window, operand 1, single buffered']
    #allocation6 [shape = 's32[1]{0}', space=sflag, size = 0x4, scoped, tag = 'scoped memory for tpu_custom_call.1']
    #allocation7 [shape = 'u8[32768]{0}', space=vmem, size = 0x8000, scoped, tag = 'input window, operand 3, single buffered']
    #allocation8 [shape = 'u8[262144]{0}', space=vmem, size = 0x40000, scoped, tag = 'output window, operand 0']
    %10 = vsyncpa [#allocation3], 0
    %s11 = scalar_lea.sflag [#allocation3], 1
    %12 = vsyncpa %s11, 0
    %13 = vsyncpa [#allocation6], 0
    %14 = vsyncpa [#allocation4], 0
    %s15 = scalar_lea.sflag [#allocation4], 1
    %16 = vsyncpa %s15, 0
    loop: start=0, step=1, limit=4
    $region2: #{tpu_custom_call.1} parent=1 // loop_pre_header
      _
    $region3: #{tpu_custom_call.1} parent=1 // loop_header
      %s18 = sphi 0, %s22
      %p19 = scmp.ge.s32.totalorder %s18, 4
      %s28 = sphi 0, %s30
      %s31 = sphi 0, %s28
      %s32 = sphi 0, %s31
      %s48 = sphi 0, %s32
      %s52 = sphi 0, %s52
      %s54 = sphi 0, %s52
      %s55 = sphi 0, %s54
      %s69 = sphi 0, %s55
      %s73 = sphi 0, %s73
      %s75 = sphi 0, %s73
      %s76 = sphi 0, %s75
      %s90 = sphi 0, %s76
      %s94 = sphi 0, %s94
      %s96 = sphi 0, %s94
      %s97 = sphi 0, %s96
      %s111 = sphi 0, %s97
      %s115 = sphi 0, %s115
      %s117 = sphi 0, %s115
      %s118 = sphi 0, %s117
      %s132 = sphi 0, %s118
      %s138 = sphi 0, %s140
      %s141 = sphi 0, %s138
      %s142 = sphi 0, %s141
      %s158 = sphi 0, %s142
    $region4: #{tpu_custom_call.1} parent=1 // loop_header_branch
      %21 = sbr.rel (%p19) target = $region8
    $region5: #{tpu_custom_call.1} parent=1 // loop_body
      %s23 = ssub.s32 %s18, 1
      %s24 = ssub.s32 %s18, 2
      %s25 = sadd.s32 %s18, 1
      %s26 = ssub.s32 %s18, %s25
      %p27 = scmp.eq.s32.totalorder %s26, 0
      %s29 = sadd.s32 %s28, 1
      %s30 = scalar_select %p27, %s28, %s29
      %p33 = pneg %p27
      %p34 = scmp.eq.s32.totalorder %s18, 1
      %p35 = por %p33, %p34
      %p36 = scmp.ne.s32.totalorder %s28, %s31
      %p37 = scmp.eq.s32.totalorder %s18, 0
      %p38 = por %p36, %p37
      %p39 = scmp.ne.s32.totalorder %s28, %s31
      %p40 = scmp.eq.s32.totalorder %s23, 1
      %p41 = por %p39, %p40
      %p42 = scmp.ne.s32.totalorder %s31, %s32
      %p43 = scmp.eq.s32.totalorder %s23, 0
      %p44 = por %p42, %p43
      %p45 = scmp.ne.s32.totalorder %s31, %s32
      %p46 = scmp.eq.s32.totalorder %s24, 1
      %p47 = por %p45, %p46
      %p49 = scmp.ne.s32.totalorder %s32, %s48
      %p50 = scmp.eq.s32.totalorder %s24, 0
      %p51 = por %p49, %p50
      %s53 = sadd.s32 %s52, 1
      %p56 = scmp.eq.s32.totalorder %s18, 1
      %p57 = scmp.ne.s32.totalorder %s52, %s54
      %p58 = scmp.eq.s32.totalorder %s18, 0
      %p59 = por %p57, %p58
      %p60 = scmp.ne.s32.totalorder %s52, %s54
      %p61 = scmp.eq.s32.totalorder %s23, 1
      %p62 = por %p60, %p61
      %p63 = scmp.ne.s32.totalorder %s54, %s55
      %p64 = scmp.eq.s32.totalorder %s23, 0
      %p65 = por %p63, %p64
      %p66 = scmp.ne.s32.totalorder %s54, %s55
      %p67 = scmp.eq.s32.totalorder %s24, 1
      %p68 = por %p66, %p67
      %p70 = scmp.ne.s32.totalorder %s55, %s69
      %p71 = scmp.eq.s32.totalorder %s24, 0
      %p72 = por %p70, %p71
      %s74 = sadd.s32 %s73, 1
      %p77 = scmp.eq.s32.totalorder %s18, 1
      %p78 = scmp.ne.s32.totalorder %s73, %s75
      %p79 = scmp.eq.s32.totalorder %s18, 0
      %p80 = por %p78, %p79
      %p81 = scmp.ne.s32.totalorder %s73, %s75
      %p82 = scmp.eq.s32.totalorder %s23, 1
      %p83 = por %p81, %p82
      %p84 = scmp.ne.s32.totalorder %s75, %s76
      %p85 = scmp.eq.s32.totalorder %s23, 0
      %p86 = por %p84, %p85
      %p87 = scmp.ne.s32.totalorder %s75, %s76
      %p88 = scmp.eq.s32.totalorder %s24, 1
      %p89 = por %p87, %p88
      %p91 = scmp.ne.s32.totalorder %s76, %s90
      %p92 = scmp.eq.s32.totalorder %s24, 0
      %p93 = por %p91, %p92
      %s95 = sadd.s32 %s94, 1
      %p98 = scmp.eq.s32.totalorder %s18, 1
      %p99 = scmp.ne.s32.totalorder %s94, %s96
      %p100 = scmp.eq.s32.totalorder %s18, 0
      %p101 = por %p99, %p100
      %p102 = scmp.ne.s32.totalorder %s94, %s96
      %p103 = scmp.eq.s32.totalorder %s23, 1
      %p104 = por %p102, %p103
      %p105 = scmp.ne.s32.totalorder %s96, %s97
      %p106 = scmp.eq.s32.totalorder %s23, 0
      %p107 = por %p105, %p106
      %p108 = scmp.ne.s32.totalorder %s96, %s97
      %p109 = scmp.eq.s32.totalorder %s24, 1
      %p110 = por %p108, %p109
      %p112 = scmp.ne.s32.totalorder %s97, %s111
      %p113 = scmp.eq.s32.totalorder %s24, 0
      %p114 = por %p112, %p113
      %s116 = sadd.s32 %s115, 1
      %p119 = scmp.eq.s32.totalorder %s18, 1
      %p120 = scmp.ne.s32.totalorder %s115, %s117
      %p121 = scmp.eq.s32.totalorder %s18, 0
      %p122 = por %p120, %p121
      %p123 = scmp.ne.s32.totalorder %s115, %s117
      %p124 = scmp.eq.s32.totalorder %s23, 1
      %p125 = por %p123, %p124
      %p126 = scmp.ne.s32.totalorder %s117, %s118
      %p127 = scmp.eq.s32.totalorder %s23, 0
      %p128 = por %p126, %p127
      %p129 = scmp.ne.s32.totalorder %s117, %s118
      %p130 = scmp.eq.s32.totalorder %s24, 1
      %p131 = por %p129, %p130
      %p133 = scmp.ne.s32.totalorder %s118, %s132
      %p134 = scmp.eq.s32.totalorder %s24, 0
      %p135 = por %p133, %p134
      %s136 = ssub.s32 %s18, %s25
      %p137 = scmp.eq.s32.totalorder %s136, 0
      %s139 = sadd.s32 %s138, 1
      %s140 = scalar_select %p137, %s138, %s139
      %p143 = pneg %p137
      %p144 = scmp.eq.s32.totalorder %s18, 1
      %p145 = por %p143, %p144
      %p146 = scmp.ne.s32.totalorder %s138, %s141
      %p147 = scmp.eq.s32.totalorder %s18, 0
      %p148 = por %p146, %p147
      %p149 = scmp.ne.s32.totalorder %s138, %s141
      %p150 = scmp.eq.s32.totalorder %s23, 1
      %p151 = por %p149, %p150
      %p152 = scmp.ne.s32.totalorder %s141, %s142
      %p153 = scmp.eq.s32.totalorder %s23, 0
      %p154 = por %p152, %p153
      %p155 = scmp.ne.s32.totalorder %s141, %s142
      %p156 = scmp.eq.s32.totalorder %s24, 1
      %p157 = por %p155, %p156
      %p159 = scmp.ne.s32.totalorder %s142, %s158
      %p160 = scmp.eq.s32.totalorder %s24, 0
      %p161 = por %p159, %p160
      %p162 = scmp.le.s32.totalorder 1, %s18
      %p163 = scmp.lt.s32.totalorder %s18, 3
      %p164 = pnand %p162, %p163
      %p165 = pneg %p164
      // Predicated region
      $region9: #{tpu_custom_call.1} parent=5 // pred_check
        _
      $region10: #{tpu_custom_call.1} parent=5 // pred_check_branch
        %167 = sbr.rel (%p164) target = $region12
      $region11: #{tpu_custom_call.1} parent=5 // pred_region
        %s168 = ssub.s32 %s18, 1
        // Predicated region
        $region13: #{tpu_custom_call.1} parent=11 // pred_check
          %p169 = pneg %p65
        $region14: #{tpu_custom_call.1} parent=11 // pred_check_branch
          %171 = sbr.rel (%p169) target = $region16
        $region15: #{tpu_custom_call.1} parent=11 // pred_region
          %173 = vsyncadd [#allocation6], 0
          %s174 = sshll.u32 %s1, 4
          %s175 = int_to_ptr.hbm [resolvable:$true] %s174
          %s176 = sshll.u32 [#allocation5], 4
          %s177 = int_to_ptr.vmem [resolvable:$true] %s176
          %182 = dma.hbm_to_vmem [thread:$0]  %s175, 1024, %s177, [#allocation6], 64, 64, 4
        $region16: #{tpu_custom_call.1} parent=11 // pred_fallthru
          _
        // Predicated region
        $region17: #{tpu_custom_call.1} parent=11 // pred_check
          %p183 = pneg %p86
        $region18: #{tpu_custom_call.1} parent=11 // pred_check_branch
          %185 = sbr.rel (%p183) target = $region20
        $region19: #{tpu_custom_call.1} parent=11 // pred_region
          _
        $region20: #{tpu_custom_call.1} parent=11 // pred_fallthru
          _
        // Predicated region
        $region21: #{tpu_custom_call.1} parent=11 // pred_check
          %p186 = pneg %p107
        $region22: #{tpu_custom_call.1} parent=11 // pred_check_branch
          %188 = sbr.rel (%p186) target = $region24
        $region23: #{tpu_custom_call.1} parent=11 // pred_region
          %190 = vsyncadd [#allocation6], 0
          %s191 = sshll.u32 %s3, 4
          %s192 = int_to_ptr.hbm [resolvable:$true] %s191
          %s193 = sshll.u32 [#allocation7], 4
          %s194 = int_to_ptr.vmem [resolvable:$true] %s193
          %199 = dma.hbm_to_vmem [thread:$0]  %s192, 1024, %s194, [#allocation6], 64, 64, 4
        $region24: #{tpu_custom_call.1} parent=11 // pred_fallthru
          _
        // Predicated region
        $region25: #{tpu_custom_call.1} parent=11 // pred_check
          %p200 = pneg %p128
        $region26: #{tpu_custom_call.1} parent=11 // pred_check_branch
          %202 = sbr.rel (%p200) target = $region28
        $region27: #{tpu_custom_call.1} parent=11 // pred_region
          _
        $region28: #{tpu_custom_call.1} parent=11 // pred_fallthru
          _
      $region12: #{tpu_custom_call.1} parent=5 // pred_fallthru
        _
      %p203 = scmp.lt.s32.totalorder %s18, 2
      // Predicated region
      $region29: #{tpu_custom_call.1} parent=5 // pred_check
        %p204 = pneg %p203
      $region30: #{tpu_custom_call.1} parent=5 // pred_check_branch
        %206 = sbr.rel (%p204) target = $region32
      $region31: #{tpu_custom_call.1} parent=5 // pred_region
        // Predicated region
        $region33: #{tpu_custom_call.1} parent=31 // pred_check
          %p207 = pneg %p38
        $region34: #{tpu_custom_call.1} parent=31 // pred_check_branch
          %209 = sbr.rel (%p207) target = $region36
        $region35: #{tpu_custom_call.1} parent=31 // pred_region
          %s210 = sand.u32 %s28, 1
          %s211 = scalar_lea.sflag [#allocation3], %s210
          %s212 = sand.u32 %s28, 1
          %s213 = smul.addr %s212, 128
          %s214 = scalar_lea.vmem [#allocation2], %s213
          %s215 = smul.u32 32, %s18
          %217 = vsyncadd %s211, 0
          %s218 = smul.addr %s215, 4
          %s219 = scalar_lea.hbm %s0, %s218
          %s220 = sshll.u32 %s219, 4
          %s221 = int_to_ptr.hbm [resolvable:$true] %s220
          %s222 = sshll.u32 %s214, 4
          %s223 = int_to_ptr.vmem [resolvable:$true] %s222
          %228 = dma.hbm_to_vmem [thread:$0]  %s221, 2048, %s223, %s211, 64, 64, 4
        $region36: #{tpu_custom_call.1} parent=31 // pred_fallthru
          _
      $region32: #{tpu_custom_call.1} parent=5 // pred_fallthru
        _
      %p229 = scmp.le.s32.totalorder 1, %s18
      %p230 = scmp.lt.s32.totalorder %s18, 3
      %p231 = pnand %p229, %p230
      %p232 = pneg %p231
      // Predicated region
      $region37: #{tpu_custom_call.1} parent=5 // pred_check
        _
      $region38: #{tpu_custom_call.1} parent=5 // pred_check_branch
        %234 = sbr.rel (%p231) target = $region40
      $region39: #{tpu_custom_call.1} parent=5 // pred_region
        %s235 = ssub.s32 %s18, 1
        %s236 = sand.u32 %s31, 1
        %s237 = scalar_lea.sflag [#allocation3], %s236
        %s238 = sand.u32 %s31, 1
        %s239 = smul.addr %s238, 128
        %s240 = scalar_lea.vmem [#allocation2], %s239
        // Predicated region
        $region41: #{tpu_custom_call.1} parent=39 // pred_check
          %p241 = pneg %p44
        $region42: #{tpu_custom_call.1} parent=39 // pred_check_branch
          %243 = sbr.rel (%p241) target = $region44
        $region43: #{tpu_custom_call.1} parent=39 // pred_region
          %245 = dma.done %s237, 2048
        $region44: #{tpu_custom_call.1} parent=39 // pred_fallthru
          _
        // Predicated region
        $region45: #{tpu_custom_call.1} parent=39 // pred_check
          %p246 = pneg %p65
        $region46: #{tpu_custom_call.1} parent=39 // pred_check_branch
          %248 = sbr.rel (%p246) target = $region48
        $region47: #{tpu_custom_call.1} parent=39 // pred_region
          %250 = dma.done [#allocation6], 1024
        $region48: #{tpu_custom_call.1} parent=39 // pred_fallthru
          _
        // Predicated region
        $region49: #{tpu_custom_call.1} parent=39 // pred_check
          %p251 = pneg %p107
        $region50: #{tpu_custom_call.1} parent=39 // pred_check_branch
          %253 = sbr.rel (%p251) target = $region52
        $region51: #{tpu_custom_call.1} parent=39 // pred_region
          %255 = dma.done [#allocation6], 1024
        $region52: #{tpu_custom_call.1} parent=39 // pred_fallthru
          _
        %s256 = sand.u32 %s31, 1
        %s257 = scalar_lea.sflag [#allocation3], %s256
        %s258 = sand.u32 %s31, 1
        %s259 = smul.addr %s258, 128
        %s260 = scalar_lea.vmem [#allocation2], %s259
        %p261 = pneg %p44
        %p262 = pneg %p41
        %p263 = pneg %p65
        %p264 = pneg %p62
        %p265 = pneg %p86
        %p266 = pneg %p83
        %p267 = pneg %p107
        %p268 = pneg %p104
        %p269 = pneg %p128
        %p270 = pneg %p125
        %p271 = pneg %p154
        %p272 = pneg %p151
        %s273 = sand.u32 %s141, 1
        %s274 = scalar_lea.sflag [#allocation4], %s273
        %s275 = sand.u32 %s141, 1
        %s276 = smul.addr %s275, 256
        %s277 = scalar_lea.vmem [#allocation8], %s276
        %s278 = smul.u32 32, %s23
        %s279 = smul.u32 32, %s23
        %v280 = vld [vmem:[%s240] sm:$0xf]
        %v281 = vld [vmem:[%s240 + $0x4] sm:$0xf]
        %v282 = vld [vmem:[%s240 + $0x8] sm:$0xf]
        %v283 = vld [vmem:[%s240 + $0xc] sm:$0xf]
        %v284 = vld [vmem:[%s240 + $0x10] sm:$0xf]
        %v285 = vld [vmem:[%s240 + $0x14] sm:$0xf]
        %v286 = vld [vmem:[%s240 + $0x18] sm:$0xf]
        %v287 = vld [vmem:[%s240 + $0x1c] sm:$0xf]
        %v288 = vld [vmem:[%s240 + $0x20] sm:$0xf]
        %v289 = vld [vmem:[%s240 + $0x24] sm:$0xf]
        %v290 = vld [vmem:[%s240 + $0x28] sm:$0xf]
        %v291 = vld [vmem:[%s240 + $0x2c] sm:$0xf]
        %v292 = vld [vmem:[%s240 + $0x30] sm:$0xf]
        %v293 = vld [vmem:[%s240 + $0x34] sm:$0xf]
        %v294 = vld [vmem:[%s240 + $0x38] sm:$0xf]
        %v295 = vld [vmem:[%s240 + $0x3c] sm:$0xf]
        %v296 = vld [vmem:[%s240 + $0x40] sm:$0xf]
        %v297 = vld [vmem:[%s240 + $0x44] sm:$0xf]
        %v298 = vld [vmem:[%s240 + $0x48] sm:$0xf]
        %v299 = vld [vmem:[%s240 + $0x4c] sm:$0xf]
        %v300 = vld [vmem:[%s240 + $0x50] sm:$0xf]
        %v301 = vld [vmem:[%s240 + $0x54] sm:$0xf]
        %v302 = vld [vmem:[%s240 + $0x58] sm:$0xf]
        %v303 = vld [vmem:[%s240 + $0x5c] sm:$0xf]
        %v304 = vld [vmem:[%s240 + $0x60] sm:$0xf]
        %v305 = vld [vmem:[%s240 + $0x64] sm:$0xf]
        %v306 = vld [vmem:[%s240 + $0x68] sm:$0xf]
        %v307 = vld [vmem:[%s240 + $0x6c] sm:$0xf]
        %v308 = vld [vmem:[%s240 + $0x70] sm:$0xf]
        %v309 = vld [vmem:[%s240 + $0x74] sm:$0xf]
        %v310 = vld [vmem:[%s240 + $0x78] sm:$0xf]
        %v311 = vld [vmem:[%s240 + $0x7c] sm:$0xf]
        %v312 = vunpack.c.l.bf16 %v280
        %v313 = vunpack.c.l.bf16 %v281
        %v314 = vunpack.c.l.bf16 %v282
        %v315 = vunpack.c.l.bf16 %v283
        %v316 = vunpack.c.l.bf16 %v284
        %v317 = vunpack.c.l.bf16 %v285
        %v318 = vunpack.c.l.bf16 %v286
        %v319 = vunpack.c.l.bf16 %v287
        %v320 = vunpack.c.l.bf16 %v288
        %v321 = vunpack.c.l.bf16 %v289
        %v322 = vunpack.c.l.bf16 %v290
        %v323 = vunpack.c.l.bf16 %v291
        %v324 = vunpack.c.l.bf16 %v292
        %v325 = vunpack.c.l.bf16 %v293
        %v326 = vunpack.c.l.bf16 %v294
        %v327 = vunpack.c.l.bf16 %v295
        %v328 = vunpack.c.l.bf16 %v296
        %v329 = vunpack.c.l.bf16 %v297
        %v330 = vunpack.c.l.bf16 %v298
        %v331 = vunpack.c.l.bf16 %v299
        %v332 = vunpack.c.l.bf16 %v300
        %v333 = vunpack.c.l.bf16 %v301
        %v334 = vunpack.c.l.bf16 %v302
        %v335 = vunpack.c.l.bf16 %v303
        %v336 = vunpack.c.l.bf16 %v304
        %v337 = vunpack.c.l.bf16 %v305
        %v338 = vunpack.c.l.bf16 %v306
        %v339 = vunpack.c.l.bf16 %v307
        %v340 = vunpack.c.l.bf16 %v308
        %v341 = vunpack.c.l.bf16 %v309
        %v342 = vunpack.c.l.bf16 %v310
        %v343 = vunpack.c.l.bf16 %v311
        %v344 = vmax.f32 %v312, 0.0
        %v345 = vmax.f32 %v313, 0.0
        %v346 = vmax.f32 %v314, 0.0
        %v347 = vmax.f32 %v315, 0.0
        %v348 = vmax.f32 %v316, 0.0
        %v349 = vmax.f32 %v317, 0.0
        %v350 = vmax.f32 %v318, 0.0
        %v351 = vmax.f32 %v319, 0.0
        %v352 = vmax.f32 %v320, 0.0
        %v353 = vmax.f32 %v321, 0.0
        %v354 = vmax.f32 %v322, 0.0
        %v355 = vmax.f32 %v323, 0.0
        %v356 = vmax.f32 %v324, 0.0
        %v357 = vmax.f32 %v325, 0.0
        %v358 = vmax.f32 %v326, 0.0
        %v359 = vmax.f32 %v327, 0.0
        %v360 = vmax.f32 %v328, 0.0
        %v361 = vmax.f32 %v329, 0.0
        %v362 = vmax.f32 %v330, 0.0
        %v363 = vmax.f32 %v331, 0.0
        %v364 = vmax.f32 %v332, 0.0
        %v365 = vmax.f32 %v333, 0.0
        %v366 = vmax.f32 %v334, 0.0
        %v367 = vmax.f32 %v335, 0.0
        %v368 = vmax.f32 %v336, 0.0
        %v369 = vmax.f32 %v337, 0.0
        %v370 = vmax.f32 %v338, 0.0
        %v371 = vmax.f32 %v339, 0.0
        %v372 = vmax.f32 %v340, 0.0
        %v373 = vmax.f32 %v341, 0.0
        %v374 = vmax.f32 %v342, 0.0
        %v375 = vmax.f32 %v343, 0.0
        %v376 = vpack.c.bf16 %v345, %v344
        %v377 = vpack.c.bf16 %v347, %v346
        %v378 = vpack.c.bf16 %v349, %v348
        %v379 = vpack.c.bf16 %v351, %v350
        %v380 = vpack.c.bf16 %v353, %v352
        %v381 = vpack.c.bf16 %v355, %v354
        %v382 = vpack.c.bf16 %v357, %v356
        %v383 = vpack.c.bf16 %v359, %v358
        %v384 = vpack.c.bf16 %v361, %v360
        %v385 = vpack.c.bf16 %v363, %v362
        %v386 = vpack.c.bf16 %v365, %v364
        %v387 = vpack.c.bf16 %v367, %v366
        %v388 = vpack.c.bf16 %v369, %v368
        %v389 = vpack.c.bf16 %v371, %v370
        %v390 = vpack.c.bf16 %v373, %v372
        %v391 = vpack.c.bf16 %v375, %v374
        %v392 = vld [vmem:[%s2] sm:$0x1]
        %v393 = vld [vmem:[%s4] sm:$0x1]
        %v394 = vld [vmem:[#allocation5] sm:$0xf]
        %v395 = vld [vmem:[#allocation5 + $0x4] sm:$0xf]
        %v396 = vld [vmem:[#allocation5 + $0x8] sm:$0xf]
        %v397 = vld [vmem:[#allocation5 + $0xc] sm:$0xf]
        %v398 = vld [vmem:[#allocation5 + $0x10] sm:$0xf]
        %v399 = vld [vmem:[#allocation5 + $0x14] sm:$0xf]
        %v400 = vld [vmem:[#allocation5 + $0x18] sm:$0xf]
        %v401 = vld [vmem:[#allocation5 + $0x1c] sm:$0xf]
        %v402 = vld [vmem:[#allocation5 + $0x20] sm:$0xf]
        %v403 = vld [vmem:[#allocation5 + $0x24] sm:$0xf]
        %v404 = vld [vmem:[#allocation5 + $0x28] sm:$0xf]
        %v405 = vld [vmem:[#allocation5 + $0x2c] sm:$0xf]
        %v406 = vld [vmem:[#allocation5 + $0x30] sm:$0xf]
        %v407 = vld [vmem:[#allocation5 + $0x34] sm:$0xf]
        %v408 = vld [vmem:[#allocation5 + $0x38] sm:$0xf]
        %v409 = vld [vmem:[#allocation5 + $0x3c] sm:$0xf]
        %v411 = vperm.slane %v392, 0
        %v429 = vunpack.c.l.b16 %v394
        %v430 = vunpack.c.l.b16 %v395
        %v431 = vunpack.c.l.b16 %v396
        %v432 = vunpack.c.l.b16 %v397
        %v433 = vunpack.c.l.b16 %v398
        %v434 = vunpack.c.l.b16 %v399
        %v435 = vunpack.c.l.b16 %v400
        %v436 = vunpack.c.l.b16 %v401
        %v437 = vunpack.c.l.b16 %v402
        %v438 = vunpack.c.l.b16 %v403
        %v439 = vunpack.c.l.b16 %v404
        %v440 = vunpack.c.l.b16 %v405
        %v441 = vunpack.c.l.b16 %v406
        %v442 = vunpack.c.l.b16 %v407
        %v443 = vunpack.c.l.b16 %v408
        %v444 = vunpack.c.l.b16 %v409
        %v445 = vpack.c.b16 %v430, %v429
        %v446 = vpack.c.b16 %v432, %v431
        %v447 = vpack.c.b16 %v434, %v433
        %v448 = vpack.c.b16 %v436, %v435
        %v449 = vpack.c.b16 %v438, %v437
        %v450 = vpack.c.b16 %v440, %v439
        %v451 = vpack.c.b16 %v442, %v441
        %v452 = vpack.c.b16 %v444, %v443
        %461 = vmatpush.bf16.msra.mxu0 %v452
        %462 = vmatpush.bf16.msra.mxu0 %v451
        %463 = vmatpush.bf16.msra.mxu0 %v450
        %464 = vmatpush.bf16.msra.mxu0 %v449
        %465 = vmatpush.bf16.msra.mxu0 %v448
        %466 = vmatpush.bf16.msra.mxu0 %v447
        %467 = vmatpush.bf16.msra.mxu0 %v446
        %468 = vmatpush.bf16.msra.mxu0 %v445
        %469 = vmatmul.bf16.gmra.mxu0 %v376
        %v470 = vpop.f32.mrf.mxu0
        %v471 = vadd.f32 %v411, %v470
        %v472 = vpop.f32.mrf.mxu0
        %v473 = vadd.f32 %v411, %v472
        %474 = vmatmul.bf16.gmra.mxu0 %v377
        %v475 = vpop.f32.mrf.mxu0
        %v476 = vadd.f32 %v411, %v475
        %v477 = vpop.f32.mrf.mxu0
        %v478 = vadd.f32 %v411, %v477
        %479 = vmatmul.bf16.gmra.mxu0 %v378
        %v480 = vpop.f32.mrf.mxu0
        %v481 = vadd.f32 %v411, %v480
        %v482 = vpop.f32.mrf.mxu0
        %v483 = vadd.f32 %v411, %v482
        %484 = vmatmul.bf16.gmra.mxu0 %v379
        %v485 = vpop.f32.mrf.mxu0
        %v486 = vadd.f32 %v411, %v485
        %v487 = vpop.f32.mrf.mxu0
        %v488 = vadd.f32 %v411, %v487
        %489 = vmatmul.bf16.gmra.mxu0 %v380
        %v490 = vpop.f32.mrf.mxu0
        %v491 = vadd.f32 %v411, %v490
        %v492 = vpop.f32.mrf.mxu0
        %v493 = vadd.f32 %v411, %v492
        %494 = vmatmul.bf16.gmra.mxu0 %v381
        %v495 = vpop.f32.mrf.mxu0
        %v496 = vadd.f32 %v411, %v495
        %v497 = vpop.f32.mrf.mxu0
        %v498 = vadd.f32 %v411, %v497
        %499 = vmatmul.bf16.gmra.mxu0 %v382
        %v500 = vpop.f32.mrf.mxu0
        %v501 = vadd.f32 %v411, %v500
        %v502 = vpop.f32.mrf.mxu0
        %v503 = vadd.f32 %v411, %v502
        %504 = vmatmul.bf16.gmra.mxu0 %v383
        %v505 = vpop.f32.mrf.mxu0
        %v506 = vadd.f32 %v411, %v505
        %v507 = vpop.f32.mrf.mxu0
        %v508 = vadd.f32 %v411, %v507
        %509 = vmatmul.bf16.gmra.mxu0 %v384
        %v510 = vpop.f32.mrf.mxu0
        %v511 = vadd.f32 %v411, %v510
        %v512 = vpop.f32.mrf.mxu0
        %v513 = vadd.f32 %v411, %v512
        %514 = vmatmul.bf16.gmra.mxu0 %v385
        %v515 = vpop.f32.mrf.mxu0
        %v516 = vadd.f32 %v411, %v515
        %v517 = vpop.f32.mrf.mxu0
        %v518 = vadd.f32 %v411, %v517
        %519 = vmatmul.bf16.gmra.mxu0 %v386
        %v520 = vpop.f32.mrf.mxu0
        %v521 = vadd.f32 %v411, %v520
        %v522 = vpop.f32.mrf.mxu0
        %v523 = vadd.f32 %v411, %v522
        %524 = vmatmul.bf16.gmra.mxu0 %v387
        %v525 = vpop.f32.mrf.mxu0
        %v526 = vadd.f32 %v411, %v525
        %v527 = vpop.f32.mrf.mxu0
        %v528 = vadd.f32 %v411, %v527
        %529 = vmatmul.bf16.gmra.mxu0 %v388
        %v530 = vpop.f32.mrf.mxu0
        %v531 = vadd.f32 %v411, %v530
        %v532 = vpop.f32.mrf.mxu0
        %v533 = vadd.f32 %v411, %v532
        %534 = vmatmul.bf16.gmra.mxu0 %v389
        %v535 = vpop.f32.mrf.mxu0
        %v536 = vadd.f32 %v411, %v535
        %v537 = vpop.f32.mrf.mxu0
        %v538 = vadd.f32 %v411, %v537
        %539 = vmatmul.bf16.gmra.mxu0 %v390
        %v540 = vpop.f32.mrf.mxu0
        %v541 = vadd.f32 %v411, %v540
        %v542 = vpop.f32.mrf.mxu0
        %v543 = vadd.f32 %v411, %v542
        %544 = vmatmul.bf16.gmra.mxu0 %v391
        %v545 = vpop.f32.mrf.mxu0
        %v546 = vadd.f32 %v411, %v545
        %v547 = vpop.f32.mrf.mxu0
        %v548 = vadd.f32 %v411, %v547
        %549 = vdwg.mxu0
        %v550 = vmax.f32 %v471, 0.0
        %v551 = vmax.f32 %v473, 0.0
        %v552 = vmax.f32 %v476, 0.0
        %v553 = vmax.f32 %v478, 0.0
        %v554 = vmax.f32 %v481, 0.0
        %v555 = vmax.f32 %v483, 0.0
        %v556 = vmax.f32 %v486, 0.0
        %v557 = vmax.f32 %v488, 0.0
        %v558 = vmax.f32 %v491, 0.0
        %v559 = vmax.f32 %v493, 0.0
        %v560 = vmax.f32 %v496, 0.0
        %v561 = vmax.f32 %v498, 0.0
        %v562 = vmax.f32 %v501, 0.0
        %v563 = vmax.f32 %v503, 0.0
        %v564 = vmax.f32 %v506, 0.0
        %v565 = vmax.f32 %v508, 0.0
        %v566 = vmax.f32 %v511, 0.0
        %v567 = vmax.f32 %v513, 0.0
        %v568 = vmax.f32 %v516, 0.0
        %v569 = vmax.f32 %v518, 0.0
        %v570 = vmax.f32 %v521, 0.0
        %v571 = vmax.f32 %v523, 0.0
        %v572 = vmax.f32 %v526, 0.0
        %v573 = vmax.f32 %v528, 0.0
        %v574 = vmax.f32 %v531, 0.0
        %v575 = vmax.f32 %v533, 0.0
        %v576 = vmax.f32 %v536, 0.0
        %v577 = vmax.f32 %v538, 0.0
        %v578 = vmax.f32 %v541, 0.0
        %v579 = vmax.f32 %v543, 0.0
        %v580 = vmax.f32 %v546, 0.0
        %v581 = vmax.f32 %v548, 0.0
        %v582 = vpack.c.bf16 %v551, %v550
        %v583 = vpack.c.bf16 %v553, %v552
        %v584 = vpack.c.bf16 %v555, %v554
        %v585 = vpack.c.bf16 %v557, %v556
        %v586 = vpack.c.bf16 %v559, %v558
        %v587 = vpack.c.bf16 %v561, %v560
        %v588 = vpack.c.bf16 %v563, %v562
        %v589 = vpack.c.bf16 %v565, %v564
        %v590 = vpack.c.bf16 %v567, %v566
        %v591 = vpack.c.bf16 %v569, %v568
        %v592 = vpack.c.bf16 %v571, %v570
        %v593 = vpack.c.bf16 %v573, %v572
        %v594 = vpack.c.bf16 %v575, %v574
        %v595 = vpack.c.bf16 %v577, %v576
        %v596 = vpack.c.bf16 %v579, %v578
        %v597 = vpack.c.bf16 %v581, %v580
        %v598 = vld [vmem:[#allocation7] sm:$0xf]
        %v599 = vld [vmem:[#allocation7 + $0x4] sm:$0xf]
        %v600 = vld [vmem:[#allocation7 + $0x8] sm:$0xf]
        %v601 = vld [vmem:[#allocation7 + $0xc] sm:$0xf]
        %v602 = vld [vmem:[#allocation7 + $0x10] sm:$0xf]
        %v603 = vld [vmem:[#allocation7 + $0x14] sm:$0xf]
        %v604 = vld [vmem:[#allocation7 + $0x18] sm:$0xf]
        %v605 = vld [vmem:[#allocation7 + $0x1c] sm:$0xf]
        %v606 = vld [vmem:[#allocation7 + $0x20] sm:$0xf]
        %v607 = vld [vmem:[#allocation7 + $0x24] sm:$0xf]
        %v608 = vld [vmem:[#allocation7 + $0x28] sm:$0xf]
        %v609 = vld [vmem:[#allocation7 + $0x2c] sm:$0xf]
        %v610 = vld [vmem:[#allocation7 + $0x30] sm:$0xf]
        %v611 = vld [vmem:[#allocation7 + $0x34] sm:$0xf]
        %v612 = vld [vmem:[#allocation7 + $0x38] sm:$0xf]
        %v613 = vld [vmem:[#allocation7 + $0x3c] sm:$0xf]
        %v615 = vperm.slane %v393, 0
        %v633 = vunpack.c.l.b16 %v598
        %v634 = vunpack.c.l.b16 %v599
        %v635 = vunpack.c.l.b16 %v600
        %v636 = vunpack.c.l.b16 %v601
        %v637 = vunpack.c.l.b16 %v602
        %v638 = vunpack.c.l.b16 %v603
        %v639 = vunpack.c.l.b16 %v604
        %v640 = vunpack.c.l.b16 %v605
        %v641 = vunpack.c.l.b16 %v606
        %v642 = vunpack.c.l.b16 %v607
        %v643 = vunpack.c.l.b16 %v608
        %v644 = vunpack.c.l.b16 %v609
        %v645 = vunpack.c.l.b16 %v610
        %v646 = vunpack.c.l.b16 %v611
        %v647 = vunpack.c.l.b16 %v612
        %v648 = vunpack.c.l.b16 %v613
        %v649 = vpack.c.b16 %v634, %v633
        %v650 = vpack.c.b16 %v636, %v635
        %v651 = vpack.c.b16 %v638, %v637
        %v652 = vpack.c.b16 %v640, %v639
        %v653 = vpack.c.b16 %v642, %v641
        %v654 = vpack.c.b16 %v644, %v643
        %v655 = vpack.c.b16 %v646, %v645
        %v656 = vpack.c.b16 %v648, %v647
        %665 = vmatpush.bf16.msra.mxu0 %v656
        %666 = vmatpush.bf16.msra.mxu0 %v655
        %667 = vmatpush.bf16.msra.mxu0 %v654
        %668 = vmatpush.bf16.msra.mxu0 %v653
        %669 = vmatpush.bf16.msra.mxu0 %v652
        %670 = vmatpush.bf16.msra.mxu0 %v651
        %671 = vmatpush.bf16.msra.mxu0 %v650
        %672 = vmatpush.bf16.msra.mxu0 %v649
        %673 = vmatmul.bf16.gmra.mxu0 %v582
        %v674 = vpop.f32.mrf.mxu0
        %v675 = vadd.f32 %v615, %v674
        %v676 = vpop.f32.mrf.mxu0
        %v677 = vadd.f32 %v615, %v676
        %678 = vmatmul.bf16.gmra.mxu0 %v583
        %v679 = vpop.f32.mrf.mxu0
        %v680 = vadd.f32 %v615, %v679
        %v681 = vpop.f32.mrf.mxu0
        %v682 = vadd.f32 %v615, %v681
        %683 = vmatmul.bf16.gmra.mxu0 %v584
        %v684 = vpop.f32.mrf.mxu0
        %v685 = vadd.f32 %v615, %v684
        %v686 = vpop.f32.mrf.mxu0
        %v687 = vadd.f32 %v615, %v686
        %688 = vmatmul.bf16.gmra.mxu0 %v585
        %v689 = vpop.f32.mrf.mxu0
        %v690 = vadd.f32 %v615, %v689
        %v691 = vpop.f32.mrf.mxu0
        %v692 = vadd.f32 %v615, %v691
        %693 = vmatmul.bf16.gmra.mxu0 %v586
        %v694 = vpop.f32.mrf.mxu0
        %v695 = vadd.f32 %v615, %v694
        %v696 = vpop.f32.mrf.mxu0
        %v697 = vadd.f32 %v615, %v696
        %698 = vmatmul.bf16.gmra.mxu0 %v587
        %v699 = vpop.f32.mrf.mxu0
        %v700 = vadd.f32 %v615, %v699
        %v701 = vpop.f32.mrf.mxu0
        %v702 = vadd.f32 %v615, %v701
        %703 = vmatmul.bf16.gmra.mxu0 %v588
        %v704 = vpop.f32.mrf.mxu0
        %v705 = vadd.f32 %v615, %v704
        %v706 = vpop.f32.mrf.mxu0
        %v707 = vadd.f32 %v615, %v706
        %708 = vmatmul.bf16.gmra.mxu0 %v589
        %v709 = vpop.f32.mrf.mxu0
        %v710 = vadd.f32 %v615, %v709
        %v711 = vpop.f32.mrf.mxu0
        %v712 = vadd.f32 %v615, %v711
        %713 = vmatmul.bf16.gmra.mxu0 %v590
        %v714 = vpop.f32.mrf.mxu0
        %v715 = vadd.f32 %v615, %v714
        %v716 = vpop.f32.mrf.mxu0
        %v717 = vadd.f32 %v615, %v716
        %718 = vmatmul.bf16.gmra.mxu0 %v591
        %v719 = vpop.f32.mrf.mxu0
        %v720 = vadd.f32 %v615, %v719
        %v721 = vpop.f32.mrf.mxu0
        %v722 = vadd.f32 %v615, %v721
        %723 = vmatmul.bf16.gmra.mxu0 %v592
        %v724 = vpop.f32.mrf.mxu0
        %v725 = vadd.f32 %v615, %v724
        %v726 = vpop.f32.mrf.mxu0
        %v727 = vadd.f32 %v615, %v726
        %728 = vmatmul.bf16.gmra.mxu0 %v593
        %v729 = vpop.f32.mrf.mxu0
        %v730 = vadd.f32 %v615, %v729
        %v731 = vpop.f32.mrf.mxu0
        %v732 = vadd.f32 %v615, %v731
        %733 = vmatmul.bf16.gmra.mxu0 %v594
        %v734 = vpop.f32.mrf.mxu0
        %v735 = vadd.f32 %v615, %v734
        %v736 = vpop.f32.mrf.mxu0
        %v737 = vadd.f32 %v615, %v736
        %738 = vmatmul.bf16.gmra.mxu0 %v595
        %v739 = vpop.f32.mrf.mxu0
        %v740 = vadd.f32 %v615, %v739
        %v741 = vpop.f32.mrf.mxu0
        %v742 = vadd.f32 %v615, %v741
        %743 = vmatmul.bf16.gmra.mxu0 %v596
        %v744 = vpop.f32.mrf.mxu0
        %v745 = vadd.f32 %v615, %v744
        %v746 = vpop.f32.mrf.mxu0
        %v747 = vadd.f32 %v615, %v746
        %748 = vmatmul.bf16.gmra.mxu0 %v597
        %v749 = vpop.f32.mrf.mxu0
        %v750 = vadd.f32 %v615, %v749
        %v751 = vpop.f32.mrf.mxu0
        %v752 = vadd.f32 %v615, %v751
        %753 = vdwg.mxu0
        %754 = vmax.xlane.f32.xlu0 %v675
        %v755 = vpop.xlane.xlu0 %754
        %756 = vmax.xlane.f32.xlu0 %v677
        %v757 = vpop.xlane.xlu0 %756
        %758 = vmax.xlane.f32.xlu0 %v680
        %v759 = vpop.xlane.xlu0 %758
        %760 = vmax.xlane.f32.xlu0 %v682
        %v761 = vpop.xlane.xlu0 %760
        %762 = vmax.xlane.f32.xlu0 %v685
        %v763 = vpop.xlane.xlu0 %762
        %764 = vmax.xlane.f32.xlu0 %v687
        %v765 = vpop.xlane.xlu0 %764
        %766 = vmax.xlane.f32.xlu0 %v690
        %v767 = vpop.xlane.xlu0 %766
        %768 = vmax.xlane.f32.xlu0 %v692
        %v769 = vpop.xlane.xlu0 %768
        %770 = vmax.xlane.f32.xlu0 %v695
        %v771 = vpop.xlane.xlu0 %770
        %772 = vmax.xlane.f32.xlu0 %v697
        %v773 = vpop.xlane.xlu0 %772
        %774 = vmax.xlane.f32.xlu0 %v700
        %v775 = vpop.xlane.xlu0 %774
        %776 = vmax.xlane.f32.xlu0 %v702
        %v777 = vpop.xlane.xlu0 %776
        %778 = vmax.xlane.f32.xlu0 %v705
        %v779 = vpop.xlane.xlu0 %778
        %780 = vmax.xlane.f32.xlu0 %v707
        %v781 = vpop.xlane.xlu0 %780
        %782 = vmax.xlane.f32.xlu0 %v710
        %v783 = vpop.xlane.xlu0 %782
        %784 = vmax.xlane.f32.xlu0 %v712
        %v785 = vpop.xlane.xlu0 %784
        %786 = vmax.xlane.f32.xlu0 %v715
        %v787 = vpop.xlane.xlu0 %786
        %788 = vmax.xlane.f32.xlu0 %v717
        %v789 = vpop.xlane.xlu0 %788
        %790 = vmax.xlane.f32.xlu0 %v720
        %v791 = vpop.xlane.xlu0 %790
        %792 = vmax.xlane.f32.xlu0 %v722
        %v793 = vpop.xlane.xlu0 %792
        %794 = vmax.xlane.f32.xlu0 %v725
        %v795 = vpop.xlane.xlu0 %794
        %796 = vmax.xlane.f32.xlu0 %v727
        %v797 = vpop.xlane.xlu0 %796
        %798 = vmax.xlane.f32.xlu0 %v730
        %v799 = vpop.xlane.xlu0 %798
        %800 = vmax.xlane.f32.xlu0 %v732
        %v801 = vpop.xlane.xlu0 %800
        %802 = vmax.xlane.f32.xlu0 %v735
        %v803 = vpop.xlane.xlu0 %802
        %804 = vmax.xlane.f32.xlu0 %v737
        %v805 = vpop.xlane.xlu0 %804
        %806 = vmax.xlane.f32.xlu0 %v740
        %v807 = vpop.xlane.xlu0 %806
        %808 = vmax.xlane.f32.xlu0 %v742
        %v809 = vpop.xlane.xlu0 %808
        %810 = vmax.xlane.f32.xlu0 %v745
        %v811 = vpop.xlane.xlu0 %810
        %812 = vmax.xlane.f32.xlu0 %v747
        %v813 = vpop.xlane.xlu0 %812
        %814 = vmax.xlane.f32.xlu0 %v750
        %v815 = vpop.xlane.xlu0 %814
        %816 = vmax.xlane.f32.xlu0 %v752
        %v817 = vpop.xlane.xlu0 %816
        %v818 = vsub.f32 %v675, %v755
        %v819 = vsub.f32 %v677, %v757
        %v820 = vsub.f32 %v680, %v759
        %v821 = vsub.f32 %v682, %v761
        %v822 = vsub.f32 %v685, %v763
        %v823 = vsub.f32 %v687, %v765
        %v824 = vsub.f32 %v690, %v767
        %v825 = vsub.f32 %v692, %v769
        %v826 = vsub.f32 %v695, %v771
        %v827 = vsub.f32 %v697, %v773
        %v828 = vsub.f32 %v700, %v775
        %v829 = vsub.f32 %v702, %v777
        %v830 = vsub.f32 %v705, %v779
        %v831 = vsub.f32 %v707, %v781
        %v832 = vsub.f32 %v710, %v783
        %v833 = vsub.f32 %v712, %v785
        %v834 = vsub.f32 %v715, %v787
        %v835 = vsub.f32 %v717, %v789
        %v836 = vsub.f32 %v720, %v791
        %v837 = vsub.f32 %v722, %v793
        %v838 = vsub.f32 %v725, %v795
        %v839 = vsub.f32 %v727, %v797
        %v840 = vsub.f32 %v730, %v799
        %v841 = vsub.f32 %v732, %v801
        %v842 = vsub.f32 %v735, %v803
        %v843 = vsub.f32 %v737, %v805
        %v844 = vsub.f32 %v740, %v807
        %v845 = vsub.f32 %v742, %v809
        %v846 = vsub.f32 %v745, %v811
        %v847 = vsub.f32 %v747, %v813
        %v848 = vsub.f32 %v750, %v815
        %v849 = vsub.f32 %v752, %v817
        %v850 = vmul.f32 %v818, 1.442695
        %v851 = vpow.pop %v850
        %v852 = vmul.f32 %v819, 1.442695
        %v853 = vpow.pop %v852
        %v854 = vmul.f32 %v820, 1.442695
        %v855 = vpow.pop %v854
        %v856 = vmul.f32 %v821, 1.442695
        %v857 = vpow.pop %v856
        %v858 = vmul.f32 %v822, 1.442695
        %v859 = vpow.pop %v858
        %v860 = vmul.f32 %v823, 1.442695
        %v861 = vpow.pop %v860
        %v862 = vmul.f32 %v824, 1.442695
        %v863 = vpow.pop %v862
        %v864 = vmul.f32 %v825, 1.442695
        %v865 = vpow.pop %v864
        %v866 = vmul.f32 %v826, 1.442695
        %v867 = vpow.pop %v866
        %v868 = vmul.f32 %v827, 1.442695
        %v869 = vpow.pop %v868
        %v870 = vmul.f32 %v828, 1.442695
        %v871 = vpow.pop %v870
        %v872 = vmul.f32 %v829, 1.442695
        %v873 = vpow.pop %v872
        %v874 = vmul.f32 %v830, 1.442695
        %v875 = vpow.pop %v874
        %v876 = vmul.f32 %v831, 1.442695
        %v877 = vpow.pop %v876
        %v878 = vmul.f32 %v832, 1.442695
        %v879 = vpow.pop %v878
        %v880 = vmul.f32 %v833, 1.442695
        %v881 = vpow.pop %v880
        %v882 = vmul.f32 %v834, 1.442695
        %v883 = vpow.pop %v882
        %v884 = vmul.f32 %v835, 1.442695
        %v885 = vpow.pop %v884
        %v886 = vmul.f32 %v836, 1.442695
        %v887 = vpow.pop %v886
        %v888 = vmul.f32 %v837, 1.442695
        %v889 = vpow.pop %v888
        %v890 = vmul.f32 %v838, 1.442695
        %v891 = vpow.pop %v890
        %v892 = vmul.f32 %v839, 1.442695
        %v893 = vpow.pop %v892
        %v894 = vmul.f32 %v840, 1.442695
        %v895 = vpow.pop %v894
        %v896 = vmul.f32 %v841, 1.442695
        %v897 = vpow.pop %v896
        %v898 = vmul.f32 %v842, 1.442695
        %v899 = vpow.pop %v898
        %v900 = vmul.f32 %v843, 1.442695
        %v901 = vpow.pop %v900
        %v902 = vmul.f32 %v844, 1.442695
        %v903 = vpow.pop %v902
        %v904 = vmul.f32 %v845, 1.442695
        %v905 = vpow.pop %v904
        %v906 = vmul.f32 %v846, 1.442695
        %v907 = vpow.pop %v906
        %v908 = vmul.f32 %v847, 1.442695
        %v909 = vpow.pop %v908
        %v910 = vmul.f32 %v848, 1.442695
        %v911 = vpow.pop %v910
        %v912 = vmul.f32 %v849, 1.442695
        %v913 = vpow.pop %v912
        %914 = vadd.xlane.f32.xlu0 %v851
        %v915 = vpop.xlane.xlu0 %914
        %916 = vadd.xlane.f32.xlu0 %v853
        %v917 = vpop.xlane.xlu0 %916
        %918 = vadd.xlane.f32.xlu0 %v855
        %v919 = vpop.xlane.xlu0 %918
        %920 = vadd.xlane.f32.xlu0 %v857
        %v921 = vpop.xlane.xlu0 %920
        %922 = vadd.xlane.f32.xlu0 %v859
        %v923 = vpop.xlane.xlu0 %922
        %924 = vadd.xlane.f32.xlu0 %v861
        %v925 = vpop.xlane.xlu0 %924
        %926 = vadd.xlane.f32.xlu0 %v863
        %v927 = vpop.xlane.xlu0 %926
        %928 = vadd.xlane.f32.xlu0 %v865
        %v929 = vpop.xlane.xlu0 %928
        %930 = vadd.xlane.f32.xlu0 %v867
        %v931 = vpop.xlane.xlu0 %930
        %932 = vadd.xlane.f32.xlu0 %v869
        %v933 = vpop.xlane.xlu0 %932
        %934 = vadd.xlane.f32.xlu0 %v871
        %v935 = vpop.xlane.xlu0 %934
        %936 = vadd.xlane.f32.xlu0 %v873
        %v937 = vpop.xlane.xlu0 %936
        %938 = vadd.xlane.f32.xlu0 %v875
        %v939 = vpop.xlane.xlu0 %938
        %940 = vadd.xlane.f32.xlu0 %v877
        %v941 = vpop.xlane.xlu0 %940
        %942 = vadd.xlane.f32.xlu0 %v879
        %v943 = vpop.xlane.xlu0 %942
        %944 = vadd.xlane.f32.xlu0 %v881
        %v945 = vpop.xlane.xlu0 %944
        %946 = vadd.xlane.f32.xlu0 %v883
        %v947 = vpop.xlane.xlu0 %946
        %948 = vadd.xlane.f32.xlu0 %v885
        %v949 = vpop.xlane.xlu0 %948
        %950 = vadd.xlane.f32.xlu0 %v887
        %v951 = vpop.xlane.xlu0 %950
        %952 = vadd.xlane.f32.xlu0 %v889
        %v953 = vpop.xlane.xlu0 %952
        %954 = vadd.xlane.f32.xlu0 %v891
        %v955 = vpop.xlane.xlu0 %954
        %956 = vadd.xlane.f32.xlu0 %v893
        %v957 = vpop.xlane.xlu0 %956
        %958 = vadd.xlane.f32.xlu0 %v895
        %v959 = vpop.xlane.xlu0 %958
        %960 = vadd.xlane.f32.xlu0 %v897
        %v961 = vpop.xlane.xlu0 %960
        %962 = vadd.xlane.f32.xlu0 %v899
        %v963 = vpop.xlane.xlu0 %962
        %964 = vadd.xlane.f32.xlu0 %v901
        %v965 = vpop.xlane.xlu0 %964
        %966 = vadd.xlane.f32.xlu0 %v903
        %v967 = vpop.xlane.xlu0 %966
        %968 = vadd.xlane.f32.xlu0 %v905
        %v969 = vpop.xlane.xlu0 %968
        %970 = vadd.xlane.f32.xlu0 %v907
        %v971 = vpop.xlane.xlu0 %970
        %972 = vadd.xlane.f32.xlu0 %v909
        %v973 = vpop.xlane.xlu0 %972
        %974 = vadd.xlane.f32.xlu0 %v911
        %v975 = vpop.xlane.xlu0 %974
        %976 = vadd.xlane.f32.xlu0 %v913
        %v977 = vpop.xlane.xlu0 %976
        %v978 = vlog2.pop %v915
        %v979 = vmul.f32 %v978, 0.6931472
        %v980 = vlog2.pop %v917
        %v981 = vmul.f32 %v980, 0.6931472
        %v982 = vlog2.pop %v919
        %v983 = vmul.f32 %v982, 0.6931472
        %v984 = vlog2.pop %v921
        %v985 = vmul.f32 %v984, 0.6931472
        %v986 = vlog2.pop %v923
        %v987 = vmul.f32 %v986, 0.6931472
        %v988 = vlog2.pop %v925
        %v989 = vmul.f32 %v988, 0.6931472
        %v990 = vlog2.pop %v927
        %v991 = vmul.f32 %v990, 0.6931472
        %v992 = vlog2.pop %v929
        %v993 = vmul.f32 %v992, 0.6931472
        %v994 = vlog2.pop %v931
        %v995 = vmul.f32 %v994, 0.6931472
        %v996 = vlog2.pop %v933
        %v997 = vmul.f32 %v996, 0.6931472
        %v998 = vlog2.pop %v935
        %v999 = vmul.f32 %v998, 0.6931472
        %v1000 = vlog2.pop %v937
        %v1001 = vmul.f32 %v1000, 0.6931472
        %v1002 = vlog2.pop %v939
        %v1003 = vmul.f32 %v1002, 0.6931472
        %v1004 = vlog2.pop %v941
        %v1005 = vmul.f32 %v1004, 0.6931472
        %v1006 = vlog2.pop %v943
        %v1007 = vmul.f32 %v1006, 0.6931472
        %v1008 = vlog2.pop %v945
        %v1009 = vmul.f32 %v1008, 0.6931472
        %v1010 = vlog2.pop %v947
        %v1011 = vmul.f32 %v1010, 0.6931472
        %v1012 = vlog2.pop %v949
        %v1013 = vmul.f32 %v1012, 0.6931472
        %v1014 = vlog2.pop %v951
        %v1015 = vmul.f32 %v1014, 0.6931472
        %v1016 = vlog2.pop %v953
        %v1017 = vmul.f32 %v1016, 0.6931472
        %v1018 = vlog2.pop %v955
        %v1019 = vmul.f32 %v1018, 0.6931472
        %v1020 = vlog2.pop %v957
        %v1021 = vmul.f32 %v1020, 0.6931472
        %v1022 = vlog2.pop %v959
        %v1023 = vmul.f32 %v1022, 0.6931472
        %v1024 = vlog2.pop %v961
        %v1025 = vmul.f32 %v1024, 0.6931472
        %v1026 = vlog2.pop %v963
        %v1027 = vmul.f32 %v1026, 0.6931472
        %v1028 = vlog2.pop %v965
        %v1029 = vmul.f32 %v1028, 0.6931472
        %v1030 = vlog2.pop %v967
        %v1031 = vmul.f32 %v1030, 0.6931472
        %v1032 = vlog2.pop %v969
        %v1033 = vmul.f32 %v1032, 0.6931472
        %v1034 = vlog2.pop %v971
        %v1035 = vmul.f32 %v1034, 0.6931472
        %v1036 = vlog2.pop %v973
        %v1037 = vmul.f32 %v1036, 0.6931472
        %v1038 = vlog2.pop %v975
        %v1039 = vmul.f32 %v1038, 0.6931472
        %v1040 = vlog2.pop %v977
        %v1041 = vmul.f32 %v1040, 0.6931472
        %v1042 = vsub.f32 %v818, %v979
        %v1043 = vsub.f32 %v819, %v981
        %v1044 = vsub.f32 %v820, %v983
        %v1045 = vsub.f32 %v821, %v985
        %v1046 = vsub.f32 %v822, %v987
        %v1047 = vsub.f32 %v823, %v989
        %v1048 = vsub.f32 %v824, %v991
        %v1049 = vsub.f32 %v825, %v993
        %v1050 = vsub.f32 %v826, %v995
        %v1051 = vsub.f32 %v827, %v997
        %v1052 = vsub.f32 %v828, %v999
        %v1053 = vsub.f32 %v829, %v1001
        %v1054 = vsub.f32 %v830, %v1003
        %v1055 = vsub.f32 %v831, %v1005
        %v1056 = vsub.f32 %v832, %v1007
        %v1057 = vsub.f32 %v833, %v1009
        %v1058 = vsub.f32 %v834, %v1011
        %v1059 = vsub.f32 %v835, %v1013
        %v1060 = vsub.f32 %v836, %v1015
        %v1061 = vsub.f32 %v837, %v1017
        %v1062 = vsub.f32 %v838, %v1019
        %v1063 = vsub.f32 %v839, %v1021
        %v1064 = vsub.f32 %v840, %v1023
        %v1065 = vsub.f32 %v841, %v1025
        %v1066 = vsub.f32 %v842, %v1027
        %v1067 = vsub.f32 %v843, %v1029
        %v1068 = vsub.f32 %v844, %v1031
        %v1069 = vsub.f32 %v845, %v1033
        %v1070 = vsub.f32 %v846, %v1035
        %v1071 = vsub.f32 %v847, %v1037
        %v1072 = vsub.f32 %v848, %v1039
        %v1073 = vsub.f32 %v849, %v1041
        %1074 = vst [vmem:[%s277] sm:$0xff] %v1042
        %1075 = vst [vmem:[%s277 + $0x8] sm:$0xff] %v1043
        %1076 = vst [vmem:[%s277 + $0x10] sm:$0xff] %v1044
        %1077 = vst [vmem:[%s277 + $0x18] sm:$0xff] %v1045
        %1078 = vst [vmem:[%s277 + $0x20] sm:$0xff] %v1046
        %1079 = vst [vmem:[%s277 + $0x28] sm:$0xff] %v1047
        %1080 = vst [vmem:[%s277 + $0x30] sm:$0xff] %v1048
        %1081 = vst [vmem:[%s277 + $0x38] sm:$0xff] %v1049
        %1082 = vst [vmem:[%s277 + $0x40] sm:$0xff] %v1050
        %1083 = vst [vmem:[%s277 + $0x48] sm:$0xff] %v1051
        %1084 = vst [vmem:[%s277 + $0x50] sm:$0xff] %v1052
        %1085 = vst [vmem:[%s277 + $0x58] sm:$0xff] %v1053
        %1086 = vst [vmem:[%s277 + $0x60] sm:$0xff] %v1054
        %1087 = vst [vmem:[%s277 + $0x68] sm:$0xff] %v1055
        %1088 = vst [vmem:[%s277 + $0x70] sm:$0xff] %v1056
        %1089 = vst [vmem:[%s277 + $0x78] sm:$0xff] %v1057
        %1090 = vst [vmem:[%s277 + $0x80] sm:$0xff] %v1058
        %1091 = vst [vmem:[%s277 + $0x88] sm:$0xff] %v1059
        %1092 = vst [vmem:[%s277 + $0x90] sm:$0xff] %v1060
        %1093 = vst [vmem:[%s277 + $0x98] sm:$0xff] %v1061
        %1094 = vst [vmem:[%s277 + $0xa0] sm:$0xff] %v1062
        %1095 = vst [vmem:[%s277 + $0xa8] sm:$0xff] %v1063
        %1096 = vst [vmem:[%s277 + $0xb0] sm:$0xff] %v1064
        %1097 = vst [vmem:[%s277 + $0xb8] sm:$0xff] %v1065
        %1098 = vst [vmem:[%s277 + $0xc0] sm:$0xff] %v1066
        %1099 = vst [vmem:[%s277 + $0xc8] sm:$0xff] %v1067
        %1100 = vst [vmem:[%s277 + $0xd0] sm:$0xff] %v1068
        %1101 = vst [vmem:[%s277 + $0xd8] sm:$0xff] %v1069
        %1102 = vst [vmem:[%s277 + $0xe0] sm:$0xff] %v1070
        %1103 = vst [vmem:[%s277 + $0xe8] sm:$0xff] %v1071
        %1104 = vst [vmem:[%s277 + $0xf0] sm:$0xff] %v1072
        %1105 = vst [vmem:[%s277 + $0xf8] sm:$0xff] %v1073
        %s1106 = sand.u32 %s141, 1
        %s1107 = scalar_lea.sflag [#allocation4], %s1106
        %s1108 = sand.u32 %s141, 1
        %s1109 = smul.addr %s1108, 256
        %s1110 = scalar_lea.vmem [#allocation8], %s1109
        // Predicated region
        $region53: #{tpu_custom_call.1} parent=39 // pred_check
          %p1111 = pneg %p151
        $region54: #{tpu_custom_call.1} parent=39 // pred_check_branch
          %1113 = sbr.rel (%p1111) target = $region56
        $region55: #{tpu_custom_call.1} parent=39 // pred_region
          %s1114 = smul.u32 32, %s23
          %1116 = vsyncadd %s1107, 0
          %s1117 = smul.addr %s1114, 8
          %s1118 = scalar_lea.hbm %s5, %s1117
          %s1119 = sshll.u32 %s1110, 4
          %s1120 = int_to_ptr.vmem [resolvable:$true] %s1119
          %s1121 = sshll.u32 %s1118, 4
          %s1122 = int_to_ptr.hbm [resolvable:$true] %s1121
          %1127 = dma.vmem_to_hbm [thread:$0]  %s1120, 4096, %s1122, %s1107, 128, 128, 8
        $region56: #{tpu_custom_call.1} parent=39 // pred_fallthru
          _
      $region40: #{tpu_custom_call.1} parent=5 // pred_fallthru
        _
      %p1128 = scmp.le.s32.totalorder 2, %s18
      // Predicated region
      $region57: #{tpu_custom_call.1} parent=5 // pred_check
        %p1129 = pneg %p1128
      $region58: #{tpu_custom_call.1} parent=5 // pred_check_branch
        %1131 = sbr.rel (%p1129) target = $region60
      $region59: #{tpu_custom_call.1} parent=5 // pred_region
        %s1132 = ssub.s32 %s18, 2
        // Predicated region
        $region61: #{tpu_custom_call.1} parent=59 // pred_check
          %p1133 = pneg %p157
        $region62: #{tpu_custom_call.1} parent=59 // pred_check_branch
          %1135 = sbr.rel (%p1133) target = $region64
        $region63: #{tpu_custom_call.1} parent=59 // pred_region
          %s1136 = sand.u32 %s142, 1
          %s1137 = scalar_lea.sflag [#allocation4], %s1136
          %s1138 = sand.u32 %s142, 1
          %s1139 = smul.addr %s1138, 256
          %s1140 = scalar_lea.vmem [#allocation8], %s1139
          %1142 = dma.done %s1137, 4096
        $region64: #{tpu_custom_call.1} parent=59 // pred_fallthru
          _
      $region60: #{tpu_custom_call.1} parent=5 // pred_fallthru
        _
    $region6: #{tpu_custom_call.1} parent=1 // loop_footer
      %s22 = sadd.s32 1, %s18
    $region7: #{tpu_custom_call.1} parent=1 // loop_footer_branch
      %17 = sbr.rel target = $region3
    $region8: #{tpu_custom_call.1} parent=1 // loop_exit
      _
    %1143 = vsyncpa [#allocation3], 1
    %s1144 = scalar_lea.sflag [#allocation3], 1
    %1145 = vsyncpa %s1144, 1
    %1146 = vsyncpa [#allocation6], 1
    %1147 = vsyncpa [#allocation4], 1
    %s1148 = scalar_lea.sflag [#allocation4], 1
    %1149 = vsyncpa %s1148, 1

</llo_original>
